<compile_context>
chip_gen: v6e
topology: v6e:2x2x1
jax: 0.10.0
libtpu: 0.0.40
codegen_flags: <defaults>
</compile_context>

<pallas_src>
import jax
import jax.numpy as jnp
from jax.experimental import pallas as pl
from jax.experimental.pallas import tpu as pltpu


def _cosine_act_kernel(tau_ref, w_ref, b_ref, mask_ref, o_ref):
    # Fused matmul + bias on the MXU; f32 accumulation.
    z = jnp.dot(tau_ref[...], w_ref[...],
                preferred_element_type=jnp.float32) + b_ref[...]
    # cos on all lanes except the identity (v2) lanes (mask==0).
    o_ref[...] = jnp.where(mask_ref[...] > 0, jnp.cos(z), z).astype(o_ref.dtype)


def _round_up(x, m):
    return ((x + m - 1) // m) * m


def fuse_cosine_params(w, b, w0, b0, *, pack=None):
    """One-time parameter fusion + lane packing.

    Returns (w_block, b_block, mask, pack) where
      w_block : (pack*in_f, pack*out_f)  block-diagonal fused weight
      b_block : (1, pack*out_f)          tiled fused bias
      mask    : (1, pack*out_f) f32      1.0 -> cos lane, 0.0 -> identity lane
    """
    in_f = w.shape[0]
    out_f = w.shape[1] + 1
    w_full = jnp.concatenate([w, w0], axis=1)                  # (in_f, out_f)
    b_full = jnp.concatenate([b, b0], axis=0)                  # (out_f,)

    if pack is None:
        pack = 128 // in_f if (0 < in_f <= 128 and 128 % in_f == 0) else 1

    if pack > 1:
        eye = jnp.eye(pack, dtype=w_full.dtype)
        # w_block[p*in_f+i, q*out_f+o] = (p==q) * w_full[i, o]
        w_block = jnp.einsum("pq,io->piqo", eye, w_full).reshape(
            pack * in_f, pack * out_f)
    else:
        w_block = w_full

    b_block = jnp.tile(b_full, pack).reshape(1, pack * out_f)
    lane = jnp.arange(pack * out_f)
    mask = ((lane % out_f) != (out_f - 1)).astype(jnp.float32).reshape(
        1, pack * out_f)
    return w_block, b_block, mask, pack


def cosine_activation_fused(tau, w_block, b_block, mask, pack, *,
                            block_rows=4096):
    """tau: (B, in_f). Returns (B, out_f) with out_f = w_block.shape[1]//pack."""
    B, in_f = tau.shape
    kp = w_block.shape[0]          # pack * in_f
    np_out = w_block.shape[1]      # pack * out_f
    out_f = np_out // pack
    assert kp == pack * in_f, "tau width inconsistent with fused weights"

    # Pad batch to a multiple of the pack factor (needed for the free reshape).
    # Padded rows compute garbage (bounded: cos / linear of zeros) and are
    # sliced off below -- invariant: no cross-row contamination.
    B_pad = _round_up(B, pack)
    if B_pad != B:
        tau = jnp.pad(tau, ((0, B_pad - B), (0, 0)))
    rows = B_pad // pack
    tau_p = tau.reshape(rows, kp)                 # lane-dense packed activations

    # Batch tile over packed rows.  block_rows=4096 packed rows (f32) is
    # ~12 MiB of double-buffered tau+out blocks -> fits every generation.
    if rows <= block_rows:
        tb = rows                                 # single full-array block
    else:
        tb = _round_up(min(block_rows, rows), 8)  # tiled: keep sublane-aligned
    grid = (pl.cdiv(rows, tb),)

    itemsize = jnp.dtype(tau.dtype).itemsize
    cost = pl.CostEstimate(
        flops=2 * rows * kp * np_out,
        transcendentals=rows * np_out,
        bytes_accessed=int(rows * kp * itemsize            # packed tau read
                           + kp * np_out * 4 + 2 * np_out * 4  # weights/bias/mask
                           + rows * np_out * itemsize),     # output write
    )

    out_p = pl.pallas_call(
        _cosine_act_kernel,
        out_shape=jax.ShapeDtypeStruct((rows, np_out), tau.dtype),
        grid=grid,
        in_specs=[
            pl.BlockSpec((tb, kp), lambda i: (i, 0)),        # batch-tiled activations
            pl.BlockSpec((kp, np_out), lambda i: (0, 0)),    # weights: VMEM-resident
            pl.BlockSpec((1, np_out), lambda i: (0, 0)),     # bias: VMEM-resident
            pl.BlockSpec((1, np_out), lambda i: (0, 0)),     # cos/identity lane mask
        ],
        out_specs=pl.BlockSpec((tb, np_out), lambda i: (i, 0)),
        compiler_params=pltpu.CompilerParams(
            dimension_semantics=("parallel",),               # megacore on v7x
            vmem_limit_bytes=32 * 1024 * 1024,               # explicit, fits all gens
        ),
        cost_estimate=cost,
    )(tau_p, w_block, b_block, mask)

    out = out_p.reshape(B_pad, out_f)                        # free reshape back
    return out[:B] if B_pad != B else out


def cosine_activation(tau, w, b, w0, b0, *, block_rows=4096):
    """Convenience wrapper matching the module's parameters (fuses per call)."""
    w_block, b_block, mask, pack = fuse_cosine_params(w, b, w0, b0)
    return cosine_activation_fused(tau, w_block, b_block, mask, pack,
                                   block_rows=block_rows)


def _reference(tau, w, b, w0, b0):
    v1 = jnp.cos(tau @ w + b)
    v2 = tau @ w0 + b0
    return jnp.concatenate([v1, v2], axis=1)


if __name__ == "__main__":
    # Deterministic synthetic parameters (shapes from the module __init__).
    in_features, out_features = 8, 16
    batch = 4

    key = jax.random.PRNGKey(0)
    k_tau, k_w0, k_b0, k_w, k_b, k_tau2 = jax.random.split(key, 6)

    tau = jax.random.normal(k_tau, (batch, in_features), dtype=jnp.float32)
    w0 = jax.random.normal(k_w0, (in_features, 1), dtype=jnp.float32)
    b0 = jax.random.normal(k_b0, (1,), dtype=jnp.float32)
    w = jax.random.normal(k_w, (in_features, out_features - 1), dtype=jnp.float32)
    b = jax.random.normal(k_b, (out_features - 1,), dtype=jnp.float32)

    # One-time parameter fusion + lane packing (hoisted out of the forward path).
    w_block, b_block, mask, pack = fuse_cosine_params(w, b, w0, b0)

    # Small-batch check (batch < pack -> padded, single full-array block).
    out = jax.block_until_ready(
        cosine_activation_fused(tau, w_block, b_block, mask, pack))
    ref = _reference(tau, w, b, w0, b0)
    assert out.shape == (batch, out_features)
    assert jnp.allclose(out, ref, atol=1e-5, rtol=1e-5)

    # Larger, non-divisible batch exercising padding + multi-step tiled grid
    # with a partial last block.
    big_b = 1000
    tau_big = jax.random.normal(k_tau2, (big_b, in_features), dtype=jnp.float32)
    out_big = jax.block_until_ready(
        cosine_activation_fused(tau_big, w_block, b_block, mask, pack,
                                block_rows=16))
    ref_big = _reference(tau_big, w, b, w0, b0)
    assert out_big.shape == (big_b, out_features)
    assert jnp.allclose(out_big, ref_big, atol=1e-5, rtol=1e-5)

    print("KERNEL_OK")
</pallas_src>

<mosaic_0001>
module attributes {stable_mosaic.version = 11 : i64} {
  func.func @_cosine_act_kernel(%arg0: i32, %arg1: memref<1x128xf32, #tpu.memory_space<vmem>>, %arg2: memref<128x256xf32, #tpu.memory_space<vmem>>, %arg3: memref<1x256xf32, #tpu.memory_space<vmem>>, %arg4: memref<1x256xf32, #tpu.memory_space<vmem>>, %arg5: memref<1x256xf32, #tpu.memory_space<vmem>>) attributes {dimension_semantics = [#tpu.dimension_semantics<parallel>], iteration_bounds = array<i64: 1>, scalar_prefetch = 0 : i64, scratch_operands = 0 : i64, tpu.core_type = #tpu.core_type<tc>, window_params = [{transform_indices = @transform_0, window_bounds = array<i64: 1, 128>}, {pipeline_mode = #tpu.pipeline_mode<synchronous>, transform_indices = @transform_1, window_bounds = array<i64: 128, 256>}, {pipeline_mode = #tpu.pipeline_mode<synchronous>, transform_indices = @transform_2, window_bounds = array<i64: 1, 256>}, {pipeline_mode = #tpu.pipeline_mode<synchronous>, transform_indices = @transform_3, window_bounds = array<i64: 1, 256>}, {transform_indices = @transform_4, window_bounds = array<i64: 1, 256>}]} {
    %c0 = arith.constant 0 : index
    %c0_0 = arith.constant 0 : index
    %0 = vector.load %arg1[%c0, %c0_0] : memref<1x128xf32, #tpu.memory_space<vmem>>, vector<1x128xf32>
    %c0_1 = arith.constant 0 : index
    %c0_2 = arith.constant 0 : index
    %1 = vector.load %arg2[%c0_1, %c0_2] : memref<128x256xf32, #tpu.memory_space<vmem>>, vector<128x256xf32>
    %cst = arith.constant dense<0.000000e+00> : vector<1x256xf32>
    %2 = tpu.matmul %0, %1, %cst {dimension_numbers = #tpu.dot_dimension_numbers<[1], [0], [0], [1], [0, 0, 1, 1], [], []>} : vector<1x128xf32>, vector<128x256xf32>, vector<1x256xf32> -> vector<1x256xf32>
    %c0_3 = arith.constant 0 : index
    %c0_4 = arith.constant 0 : index
    %3 = vector.load %arg3[%c0_3, %c0_4] : memref<1x256xf32, #tpu.memory_space<vmem>>, vector<1x256xf32>
    %4 = arith.addf %2, %3 : vector<1x256xf32>
    %c0_5 = arith.constant 0 : index
    %c0_6 = arith.constant 0 : index
    %5 = vector.load %arg4[%c0_5, %c0_6] : memref<1x256xf32, #tpu.memory_space<vmem>>, vector<1x256xf32>
    %cst_7 = arith.constant 0.000000e+00 : f32
    %6 = vector.broadcast %cst_7 : f32 to vector<1x256xf32>
    %7 = arith.cmpf ogt, %5, %6 : vector<1x256xf32>
    %8 = math.cos %4 : vector<1x256xf32>
    %9 = arith.select %7, %8, %4 : vector<1x256xi1>, vector<1x256xf32>
    %c0_8 = arith.constant 0 : index
    %c0_9 = arith.constant 0 : index
    %10 = vector.load %arg5[%c0_8, %c0_9] : memref<1x256xf32, #tpu.memory_space<vmem>>, vector<1x256xf32>
    tpu.vector_store %arg5[%c0_8, %c0_9], %9 {strides = array<i32>} : memref<1x256xf32, #tpu.memory_space<vmem>>, vector<1x256xf32>,
    return
  }
  func.func @transform_0(%arg0: i32) -> (i32, i32) {
    %c0_i32 = arith.constant 0 : i32
    %c0_i32_0 = arith.constant 0 : i32
    return %arg0, %c0_i32 : i32, i32
  }
  func.func @transform_1(%arg0: i32) -> (i32, i32) {
    %c0_i32 = arith.constant 0 : i32
    %c0_i32_0 = arith.constant 0 : i32
    %c0_i32_1 = arith.constant 0 : i32
    return %c0_i32, %c0_i32_0 : i32, i32
  }
  func.func @transform_2(%arg0: i32) -> (i32, i32) {
    %c0_i32 = arith.constant 0 : i32
    %c0_i32_0 = arith.constant 0 : i32
    %c0_i32_1 = arith.constant 0 : i32
    return %c0_i32, %c0_i32_0 : i32, i32
  }
  func.func @transform_3(%arg0: i32) -> (i32, i32) {
    %c0_i32 = arith.constant 0 : i32
    %c0_i32_0 = arith.constant 0 : i32
    %c0_i32_1 = arith.constant 0 : i32
    return %c0_i32, %c0_i32_0 : i32, i32
  }
  func.func @transform_4(%arg0: i32) -> (i32, i32) {
    %c0_i32 = arith.constant 0 : i32
    %c0_i32_0 = arith.constant 0 : i32
    return %arg0, %c0_i32 : i32, i32
  }
}

</mosaic_0001>

<llo_original>
// kernel: tpu_custom_call.1
$region0: #{tpu_custom_call.1}
  #allocation0 [shape = 'u32[]', space=smem, size = 0x4, offset = 0x4, fixed_abs, tag = 'smem constant byte address 0x4 - core index']
  #allocation1 [shape = 'u32[144,128]{1,0:T(1,128)}', space=vmem, size = 0x12000, scoped, tag = 'internal scratch']
  %s0 = inlined_call_operand.hbm [shape: f32[1,128], index: 0, kind: input, shape index: {}]
  %s1 = inlined_call_operand.hbm [shape: f32[128,256], index: 1, kind: input, shape index: {}]
  %s2 = inlined_call_operand.vmem [shape: f32[1,256], index: 2, kind: input, shape index: {}]
  %s3 = inlined_call_operand.vmem [shape: f32[1,256], index: 3, kind: input, shape index: {}]
  %s4 = inlined_call_operand.hbm [shape: f32[1,256], index: 4, kind: output, shape index: {}]
  %s5 = sld [smem:[#allocation0]]
  $region34: #{tpu_custom_call.1} parent=0
    _
  %s7 = ssub.s32 1, %s5
  %s8 = scalar_select 0, %s7, %s5
  $region1: #{tpu_custom_call.1} parent=0
    #allocation2 [shape = 'u8[512]{0}', space=vmem, size = 0x400, scoped, tag = 'input window, operand 0, single buffered']
    #allocation3 [shape = 's32[1]{0}', space=sflag, size = 0x4, scoped, tag = 'scoped memory for tpu_custom_call.1']
    #allocation4 [shape = 's32[1]{0}', space=sflag, size = 0x4, scoped, tag = 'scoped memory for tpu_custom_call.1']
    #allocation5 [shape = 'u8[131072]{0}', space=vmem, size = 0x20000, scoped, tag = 'input window, operand 1, single buffered']
    #allocation6 [shape = 's32[1]{0}', space=sflag, size = 0x4, scoped, tag = 'scoped memory for tpu_custom_call.1']
    #allocation7 [shape = 'u8[1024]{0}', space=vmem, size = 0x400, scoped, tag = 'output window, operand 0, single buffered']
    %9 = vsyncpa [#allocation3], 0
    %10 = vsyncpa [#allocation6], 0
    %11 = vsyncpa [#allocation4], 0
    // Predicated region
    $region2: #{tpu_custom_call.1} parent=1 // pred_check
      _
    $region3: #{tpu_custom_call.1} parent=1 // pred_check_branch
      %13 = sbr.rel (0) target = $region5
    $region4: #{tpu_custom_call.1} parent=1 // pred_region
      %s15 = ssub.s32 16, 16
      %16 = vsyncadd [#allocation3], %s15
      %s18 = sshll.u32 [#allocation2], 4
      %s19 = int_to_ptr.vmem [resolvable:$true] %s18
      %21 = dma.hbm_to_vmem [thread:$0]  %s0, 16, %s19, [#allocation3]
    $region5: #{tpu_custom_call.1} parent=1 // pred_fallthru
      _
    // Predicated region
    $region6: #{tpu_custom_call.1} parent=1 // pred_check
      _
    $region7: #{tpu_custom_call.1} parent=1 // pred_check_branch
      %23 = sbr.rel (0) target = $region9
    $region8: #{tpu_custom_call.1} parent=1 // pred_region
      %s25 = ssub.s32 4096, 4096
      %26 = vsyncadd [#allocation6], %s25
      %s27 = sshll.u32 [#allocation5], 4
      %s28 = int_to_ptr.vmem [resolvable:$true] %s27
      %33 = dma.hbm_to_vmem [thread:$0]  %s1, 4096, %s28, [#allocation6], 256, 256, 16
    $region9: #{tpu_custom_call.1} parent=1 // pred_fallthru
      _
    // Predicated region
    $region10: #{tpu_custom_call.1} parent=1 // pred_check
      _
    $region11: #{tpu_custom_call.1} parent=1 // pred_check_branch
      %35 = sbr.rel (0) target = $region13
    $region12: #{tpu_custom_call.1} parent=1 // pred_region
      _
    $region13: #{tpu_custom_call.1} parent=1 // pred_fallthru
      _
    // Predicated region
    $region14: #{tpu_custom_call.1} parent=1 // pred_check
      _
    $region15: #{tpu_custom_call.1} parent=1 // pred_check_branch
      %37 = sbr.rel (0) target = $region17
    $region16: #{tpu_custom_call.1} parent=1 // pred_region
      _
    $region17: #{tpu_custom_call.1} parent=1 // pred_fallthru
      _
    // Predicated region
    $region18: #{tpu_custom_call.1} parent=1 // pred_check
      _
    $region19: #{tpu_custom_call.1} parent=1 // pred_check_branch
      %39 = sbr.rel (0) target = $region21
    $region20: #{tpu_custom_call.1} parent=1 // pred_region
      %40 = dma.done [#allocation3], 16
    $region21: #{tpu_custom_call.1} parent=1 // pred_fallthru
      _
    // Predicated region
    $region22: #{tpu_custom_call.1} parent=1 // pred_check
      _
    $region23: #{tpu_custom_call.1} parent=1 // pred_check_branch
      %42 = sbr.rel (0) target = $region25
    $region24: #{tpu_custom_call.1} parent=1 // pred_region
      %43 = dma.done [#allocation6], 4096
    $region25: #{tpu_custom_call.1} parent=1 // pred_fallthru
      _
    %v44 = vld [vmem:[#allocation2] sm:$0x1]
    %v45 = vld [vmem:[#allocation5] sm:$0xff]
    %v46 = vld [vmem:[#allocation5 + $0x8] sm:$0xff]
    %v47 = vld [vmem:[#allocation5 + $0x10] sm:$0xff]
    %v48 = vld [vmem:[#allocation5 + $0x18] sm:$0xff]
    %v49 = vld [vmem:[#allocation5 + $0x20] sm:$0xff]
    %v50 = vld [vmem:[#allocation5 + $0x28] sm:$0xff]
    %v51 = vld [vmem:[#allocation5 + $0x30] sm:$0xff]
    %v52 = vld [vmem:[#allocation5 + $0x38] sm:$0xff]
    %v53 = vld [vmem:[#allocation5 + $0x40] sm:$0xff]
    %v54 = vld [vmem:[#allocation5 + $0x48] sm:$0xff]
    %v55 = vld [vmem:[#allocation5 + $0x50] sm:$0xff]
    %v56 = vld [vmem:[#allocation5 + $0x58] sm:$0xff]
    %v57 = vld [vmem:[#allocation5 + $0x60] sm:$0xff]
    %v58 = vld [vmem:[#allocation5 + $0x68] sm:$0xff]
    %v59 = vld [vmem:[#allocation5 + $0x70] sm:$0xff]
    %v60 = vld [vmem:[#allocation5 + $0x78] sm:$0xff]
    %v61 = vld [vmem:[#allocation5 + $0x80] sm:$0xff]
    %v62 = vld [vmem:[#allocation5 + $0x88] sm:$0xff]
    %v63 = vld [vmem:[#allocation5 + $0x90] sm:$0xff]
    %v64 = vld [vmem:[#allocation5 + $0x98] sm:$0xff]
    %v65 = vld [vmem:[#allocation5 + $0xa0] sm:$0xff]
    %v66 = vld [vmem:[#allocation5 + $0xa8] sm:$0xff]
    %v67 = vld [vmem:[#allocation5 + $0xb0] sm:$0xff]
    %v68 = vld [vmem:[#allocation5 + $0xb8] sm:$0xff]
    %v69 = vld [vmem:[#allocation5 + $0xc0] sm:$0xff]
    %v70 = vld [vmem:[#allocation5 + $0xc8] sm:$0xff]
    %v71 = vld [vmem:[#allocation5 + $0xd0] sm:$0xff]
    %v72 = vld [vmem:[#allocation5 + $0xd8] sm:$0xff]
    %v73 = vld [vmem:[#allocation5 + $0xe0] sm:$0xff]
    %v74 = vld [vmem:[#allocation5 + $0xe8] sm:$0xff]
    %v75 = vld [vmem:[#allocation5 + $0xf0] sm:$0xff]
    %v76 = vld [vmem:[#allocation5 + $0xf8] sm:$0xff]
    %v77 = vld [vmem:[%s2] sm:$0x3]
    %v79 = vlaneseq
    %v80 = vshrl.u32 %v79, 7
    %v81 = vsub.s32 0, %v80
    %v82 = vrot.slane %v77, %v81
    %v83 = vlaneseq
    %v84 = vshrl.u32 %v83, 7
    %v85 = vsub.s32 1, %v84
    %v86 = vrot.slane %v77, %v85
    %89 = vmatprep.subr.mxu0 %v76
    %90 = vmatpush1.msra.mxu0 %v75
    %91 = vmatprep.subr.mxu0 %v74
    %92 = vmatpush1.msra.mxu0 %v73
    %93 = vmatprep.subr.mxu0 %v72
    %94 = vmatpush1.msra.mxu0 %v71
    %95 = vmatprep.subr.mxu0 %v70
    %96 = vmatpush1.msra.mxu0 %v69
    %97 = vmatprep.subr.mxu0 %v68
    %98 = vmatpush1.msra.mxu0 %v67
    %99 = vmatprep.subr.mxu0 %v66
    %100 = vmatpush1.msra.mxu0 %v65
    %101 = vmatprep.subr.mxu0 %v64
    %102 = vmatpush1.msra.mxu0 %v63
    %103 = vmatprep.subr.mxu0 %v62
    %104 = vmatpush1.msra.mxu0 %v61
    %105 = vmatprep.subr.mxu0 %v60
    %106 = vmatpush1.msra.mxu0 %v59
    %107 = vmatprep.subr.mxu0 %v58
    %108 = vmatpush1.msra.mxu0 %v57
    %109 = vmatprep.subr.mxu0 %v56
    %110 = vmatpush1.msra.mxu0 %v55
    %111 = vmatprep.subr.mxu0 %v54
    %112 = vmatpush1.msra.mxu0 %v53
    %113 = vmatprep.subr.mxu0 %v52
    %114 = vmatpush1.msra.mxu0 %v51
    %115 = vmatprep.subr.mxu0 %v50
    %116 = vmatpush1.msra.mxu0 %v49
    %117 = vmatprep.subr.mxu0 %v48
    %118 = vmatpush1.msra.mxu0 %v47
    %119 = vmatprep.subr.mxu0 %v46
    %120 = vmatpush1.msra.mxu0 %v45
    %121 = vmatprep.subr.mxu0 0.0
    %122 = vmatpush2.msra.mxu0 0.0
    %123 = vmatprep.subr.mxu0 0.0
    %124 = vmatpush2.msra.mxu0 0.0
    %125 = vmatprep.subr.mxu0 0.0
    %126 = vmatpush2.msra.mxu0 0.0
    %127 = vmatprep.subr.mxu0 0.0
    %128 = vmatpush2.msra.mxu0 0.0
    %129 = vmatprep.subr.mxu0 0.0
    %130 = vmatpush2.msra.mxu0 0.0
    %131 = vmatprep.subr.mxu0 0.0
    %132 = vmatpush2.msra.mxu0 0.0
    %133 = vmatprep.subr.mxu0 0.0
    %134 = vmatpush2.msra.mxu0 0.0
    %135 = vmatprep.subr.mxu0 0.0
    %136 = vmatpush2.msra.mxu0 0.0
    %137 = vmatprep.subr.mxu0 0.0
    %138 = vmatpush2.msra.mxu0 0.0
    %139 = vmatprep.subr.mxu0 0.0
    %140 = vmatpush2.msra.mxu0 0.0
    %141 = vmatprep.subr.mxu0 0.0
    %142 = vmatpush2.msra.mxu0 0.0
    %143 = vmatprep.subr.mxu0 0.0
    %144 = vmatpush2.msra.mxu0 0.0
    %145 = vmatprep.subr.mxu0 0.0
    %146 = vmatpush2.msra.mxu0 0.0
    %147 = vmatprep.subr.mxu0 0.0
    %148 = vmatpush2.msra.mxu0 0.0
    %149 = vmatprep.subr.mxu0 0.0
    %150 = vmatpush2.msra.mxu0 0.0
    %151 = vmatprep.subr.mxu0 0.0
    %152 = vmatpush2.msra.mxu0 0.0
    %153 = vmatprep.mubr.f32.mxu0 0.0
    %154 = vmatmul.mubr.f32.gmra.mxu0 %v44
    %v155 = vpop.f32.mrf.mxu0
    %v156 = vadd.f32 %v82, %v155
    %v157 = vpop.f32.mrf.mxu0
    %v158 = vadd.f32 %v86, %v157
    %159 = vdwg.mxu0
    %v160 = vld [vmem:[%s3] sm:$0x3]
    %vm161 = vcmp.gt.f32.partialorder %v160, 0.0
    %v162 = vand.u32 2147483647, %v156
    %vm163 = vcmp.le.f32.partialorder %v162, 0.7853982
    %vm164 = vcmp.lt.s32.totalorder %v156, 0
    %v165 = vand.u32 %v156, 2139095040
    %v166 = vshrl.u32 %v165, 23
    %v167 = vsub.s32 %v166, 127
    %v168 = vand.u32 2147483647, %v156
    %v169 = vand.u32 %v168, 8388607
    %v170 = vor.u32 %v169, 8388608
    %v171 = vsub.s32 0, %v170
    %v172 = vadd.s32 %v167, 1
    %vm173 = vcmp.gt.s32.totalorder %v172, 0
    %v174 = vsel %vm173, %v172, 0
    %v175 = vshrl.u32 %v174, 5
    %v176 = vand.u32 %v174, 31
    %v177 = vsub.s32 32, %v176
    %v178 = vshrl.u32 683565275, %v177
    %v179 = vshll.u32 683565275, %v176
    %v180 = vshrl.u32 2475754826, %v177
    %v181 = vor.u32 %v179, %v180
    %v182 = vshll.u32 2475754826, %v176
    %v183 = vshrl.u32 2131351028, %v177
    %v184 = vor.u32 %v182, %v183
    %v185 = vshll.u32 2131351028, %v176
    %v186 = vshrl.u32 2102212464, %v177
    %v187 = vor.u32 %v185, %v186
    %v188 = vshll.u32 2102212464, %v176
    %v189 = vshrl.u32 920167782, %v177
    %v190 = vor.u32 %v188, %v189
    %v191 = vshll.u32 920167782, %v176
    %v192 = vshrl.u32 1326507024, %v177
    %v193 = vor.u32 %v191, %v192
    %vm194 = vcmp.lt.s32.totalorder %v175, 1
    %vm195 = vcmp.lt.s32.totalorder %v175, 2
    %vm196 = vcmp.lt.s32.totalorder %v175, 3
    %vm197 = vcmp.lt.s32.totalorder %v175, 4
    %v198 = vsel %vm194, %v178, %v181
    %v199 = vsel %vm197, %v187, 2102212464
    %v200 = vsel %vm196, %v184, %v199
    %v201 = vsel %vm195, %v198, %v200
    %v202 = vsel %vm194, %v181, %v184
    %v203 = vsel %vm197, %v190, 920167782
    %v204 = vsel %vm196, %v187, %v203
    %v205 = vsel %vm195, %v202, %v204
    %v206 = vsel %vm194, %v184, %v187
    %v207 = vsel %vm197, %v193, 1326507024
    %v208 = vsel %vm196, %v190, %v207
    %v209 = vsel %vm195, %v206, %v208
    %v210 = vshll.u32 %v170, 8
    %v211 = vmul.u32.u64.compose %v210, %v209
    %v212 = vextract.low.u32 %v211
    %v213 = vextract.high.u32 %v211
    %v214 = vmul.u32.u64.compose %v210, %v205
    %v215 = vextract.low.u32 %v214
    %v216 = vextract.high.u32 %v214
    %v217 = vmul.u32 %v210, %v201
    %v218 = vadd.s32 %v213, %v215
    %vm219 = vc.u32 %v213, %v215
    %v220 = vadd.s32 %v216, 1
    %v221 = vsel %vm219, %v220, %v216
    %v222 = vadd.s32 %v217, %v221
    %v223 = vadd.s32 %v222, 536870912
    %v224 = vshrl.u32 %v223, 30
    %v225 = vshll.u32 %v224, 30
    %v226 = vsub.s32 %v222, %v225
    %vm227 = vcmp.lt.s32.totalorder %v226, 0
    %v228 = vsub.s32 0, %v226
    %v229 = vsel %vm227, %v228, %v226
    %v230 = vclz %v229
    %v231 = vsub.s32 %v230, 2
    %vm232 = vcmp.gt.s32.totalorder 0, %v231
    %v233 = vsel %vm232, 0, %v231
    %v234 = vsub.s32 32, %v233
    %v235 = vshll.u32 %v226, %v233
    %v236 = vshrl.u32 %v218, %v234
    %v237 = vor.u32 %v235, %v236
    %v238 = vsub.s32 4294967266, %v233
    %v239 = vadd.s32 %v238, 127
    %v240 = vshll.u32 %v239, 23
    %v241 = vor.u32 4788187, %v240
    %v242 = vand.u32 2147483647, %v241
    %v244 = vcvt.s32.f32 %v237
    %v245 = vmul.f32 %v244, %v242
    %v246 = vxor.u32 %v245, 2147483648
    %v247 = vsel %vm164, %v246, %v245
    %v248 = vsub.s32 4, %v224
    %v249 = vsel %vm164, %v248, %v224
    %v250 = vsel %vm163, %v156, %v247
    %v251 = vsel %vm163, 0, %v249
    %v252 = vcosq.f32.pop %v250
    %v253 = vsinq.f32.pop %v250
    %vm254 = vweird.f32 %v156
    %v255 = vand.u32 %v251, 3
    %vm256 = vcmp.lt.s32.totalorder %v255, 2
    %vm257 = vcmp.eq.s32.totalorder %v255, 0
    %v258 = vxor.u32 %v253, 2147483648
    %v259 = vsel %vm257, %v252, %v258
    %vm260 = vcmp.eq.s32.totalorder %v255, 2
    %v261 = vxor.u32 %v252, 2147483648
    %v262 = vsel %vm260, %v261, %v253
    %v263 = vsel %vm256, %v259, %v262
    %v264 = vsel %vm254, nan, %v263
    %v265 = vand.u32 2147483647, %v158
    %vm266 = vcmp.le.f32.partialorder %v265, 0.7853982
    %vm267 = vcmp.lt.s32.totalorder %v158, 0
    %v268 = vand.u32 %v158, 2139095040
    %v269 = vshrl.u32 %v268, 23
    %v270 = vsub.s32 %v269, 127
    %v271 = vand.u32 2147483647, %v158
    %v272 = vand.u32 %v271, 8388607
    %v273 = vor.u32 %v272, 8388608
    %v274 = vsub.s32 0, %v273
    %v275 = vadd.s32 %v270, 1
    %vm276 = vcmp.gt.s32.totalorder %v275, 0
    %v277 = vsel %vm276, %v275, 0
    %v278 = vshrl.u32 %v277, 5
    %v279 = vand.u32 %v277, 31
    %v280 = vsub.s32 32, %v279
    %v281 = vshrl.u32 683565275, %v280
    %v282 = vshll.u32 683565275, %v279
    %v283 = vshrl.u32 2475754826, %v280
    %v284 = vor.u32 %v282, %v283
    %v285 = vshll.u32 2475754826, %v279
    %v286 = vshrl.u32 2131351028, %v280
    %v287 = vor.u32 %v285, %v286
    %v288 = vshll.u32 2131351028, %v279
    %v289 = vshrl.u32 2102212464, %v280
    %v290 = vor.u32 %v288, %v289
    %v291 = vshll.u32 2102212464, %v279
    %v292 = vshrl.u32 920167782, %v280
    %v293 = vor.u32 %v291, %v292
    %v294 = vshll.u32 920167782, %v279
    %v295 = vshrl.u32 1326507024, %v280
    %v296 = vor.u32 %v294, %v295
    %vm297 = vcmp.lt.s32.totalorder %v278, 1
    %vm298 = vcmp.lt.s32.totalorder %v278, 2
    %vm299 = vcmp.lt.s32.totalorder %v278, 3
    %vm300 = vcmp.lt.s32.totalorder %v278, 4
    %v301 = vsel %vm297, %v281, %v284
    %v302 = vsel %vm300, %v290, 2102212464
    %v303 = vsel %vm299, %v287, %v302
    %v304 = vsel %vm298, %v301, %v303
    %v305 = vsel %vm297, %v284, %v287
    %v306 = vsel %vm300, %v293, 920167782
    %v307 = vsel %vm299, %v290, %v306
    %v308 = vsel %vm298, %v305, %v307
    %v309 = vsel %vm297, %v287, %v290
    %v310 = vsel %vm300, %v296, 1326507024
    %v311 = vsel %vm299, %v293, %v310
    %v312 = vsel %vm298, %v309, %v311
    %v313 = vshll.u32 %v273, 8
    %v314 = vmul.u32.u64.compose %v313, %v312
    %v315 = vextract.low.u32 %v314
    %v316 = vextract.high.u32 %v314
    %v317 = vmul.u32.u64.compose %v313, %v308
    %v318 = vextract.low.u32 %v317
    %v319 = vextract.high.u32 %v317
    %v320 = vmul.u32 %v313, %v304
    %v321 = vadd.s32 %v316, %v318
    %vm322 = vc.u32 %v316, %v318
    %v323 = vadd.s32 %v319, 1
    %v324 = vsel %vm322, %v323, %v319
    %v325 = vadd.s32 %v320, %v324
    %v326 = vadd.s32 %v325, 536870912
    %v327 = vshrl.u32 %v326, 30
    %v328 = vshll.u32 %v327, 30
    %v329 = vsub.s32 %v325, %v328
    %vm330 = vcmp.lt.s32.totalorder %v329, 0
    %v331 = vsub.s32 0, %v329
    %v332 = vsel %vm330, %v331, %v329
    %v333 = vclz %v332
    %v334 = vsub.s32 %v333, 2
    %vm335 = vcmp.gt.s32.totalorder 0, %v334
    %v336 = vsel %vm335, 0, %v334
    %v337 = vsub.s32 32, %v336
    %v338 = vshll.u32 %v329, %v336
    %v339 = vshrl.u32 %v321, %v337
    %v340 = vor.u32 %v338, %v339
    %v341 = vsub.s32 4294967266, %v336
    %v342 = vadd.s32 %v341, 127
    %v343 = vshll.u32 %v342, 23
    %v344 = vor.u32 4788187, %v343
    %v345 = vand.u32 2147483647, %v344
    %v347 = vcvt.s32.f32 %v340
    %v348 = vmul.f32 %v347, %v345
    %v349 = vxor.u32 %v348, 2147483648
    %v350 = vsel %vm267, %v349, %v348
    %v351 = vsub.s32 4, %v327
    %v352 = vsel %vm267, %v351, %v327
    %v353 = vsel %vm266, %v158, %v350
    %v354 = vsel %vm266, 0, %v352
    %v355 = vcosq.f32.pop %v353
    %v356 = vsinq.f32.pop %v353
    %vm357 = vweird.f32 %v158
    %v358 = vand.u32 %v354, 3
    %vm359 = vcmp.lt.s32.totalorder %v358, 2
    %vm360 = vcmp.eq.s32.totalorder %v358, 0
    %v361 = vxor.u32 %v356, 2147483648
    %v362 = vsel %vm360, %v355, %v361
    %vm363 = vcmp.eq.s32.totalorder %v358, 2
    %v364 = vxor.u32 %v355, 2147483648
    %v365 = vsel %vm363, %v364, %v356
    %v366 = vsel %vm359, %v362, %v365
    %v367 = vsel %vm357, nan, %v366
    %v370 = vcombine.low %v264, %v367
    %v372 = vunpack.c.l.s4 1966171168
    %v373 = vunpack.c.0.s8 %v372
    %v374 = vlaneseq
    %v375 = vshrl.u32 %v374, 7
    %v376 = vsub.s32 %v373, %v375
    %v377 = vrot.slane %v370, %v376
    %v379 = vunpack.c.l.s4 1966171168
    %v380 = vunpack.c.0.s8 %v379
    %v381 = vlaneseq
    %v382 = vshrl.u32 %v381, 7
    %v383 = vsub.s32 %v380, %v382
    %v384 = vrot.slane %v377, %v383
    %v388 = vcombine.low %v156, %v158
    %v390 = vunpack.c.l.s4 1966171168
    %v391 = vunpack.c.0.s8 %v390
    %v392 = vlaneseq
    %v393 = vshrl.u32 %v392, 7
    %v394 = vsub.s32 %v391, %v393
    %v395 = vrot.slane %v388, %v394
    %v397 = vunpack.c.l.s4 1966171168
    %v398 = vunpack.c.0.s8 %v397
    %v399 = vlaneseq
    %v400 = vshrl.u32 %v399, 7
    %v401 = vsub.s32 %v398, %v400
    %v402 = vrot.slane %v395, %v401
    %v404 = vsel %vm161, %v384, %v402
    %v405 = vlaneseq
    %vm406 = vcmp.ge.s32.totalorder %v405, 0
    %vm407 = vcmp.lt.s32.totalorder %v405, 256
    %vm408 = vmand %vm406, %vm407
    %409 = vst.msk [vmem:[#allocation7] sm:$0x3] %vm408, %v404
    // Predicated region
    $region26: #{tpu_custom_call.1} parent=1 // pred_check
      _
    $region27: #{tpu_custom_call.1} parent=1 // pred_check_branch
      %411 = sbr.rel (0) target = $region29
    $region28: #{tpu_custom_call.1} parent=1 // pred_region
      %s413 = ssub.s32 32, 32
      %414 = vsyncadd [#allocation4], %s413
      %s416 = sshll.u32 [#allocation7], 4
      %s417 = int_to_ptr.vmem [resolvable:$true] %s416
      %419 = dma.vmem_to_hbm [thread:$0]  %s417, 32, %s4, [#allocation4]
    $region29: #{tpu_custom_call.1} parent=1 // pred_fallthru
      _
    // Predicated region
    $region30: #{tpu_custom_call.1} parent=1 // pred_check
      _
    $region31: #{tpu_custom_call.1} parent=1 // pred_check_branch
      %421 = sbr.rel (0) target = $region33
    $region32: #{tpu_custom_call.1} parent=1 // pred_region
      %422 = dma.done [#allocation4], 32
    $region33: #{tpu_custom_call.1} parent=1 // pred_fallthru
      _
    %423 = vsyncpa [#allocation3], 1
    %424 = vsyncpa [#allocation6], 1
    %425 = vsyncpa [#allocation4], 1

</llo_original>
